<compile_context>
chip_gen: v7x
topology: tpu7x:2x2x1
jax: 0.10.0
libtpu: 0.0.40
codegen_flags: <defaults>
</compile_context>

<pallas_src>
from functools import partial

import jax
import jax.numpy as jnp
import numpy as np
from jax import lax
from jax.experimental import pallas as pl
from jax.experimental.pallas import tpu as pltpu

# Stand-ins for global_variables.* reward weights (deterministic constants).
MP_REWARD_WEIGHT = 1.0
PPL_REWARD_WEIGHT = 0.5
Z1_REWARD_WEIGHT = 2.0
Z2_REWARD_WEIGHT = 2.0
Z3_REWARD_WEIGHT = 1.5
UNK_REWARD_WEIGHT = 3.0


def _cdiv(a, b):
    return -(-a // b)


def _round_up(x, m):
    return _cdiv(x, m) * m


def _choose_tiling(B, S):
    """Pick (tile_rows, n_tiles) for the batch grid (generation-aware budget)."""
    row_align = 8                               # f32/i32 sublane tile
    hbm_row_bytes = 20 * S + 64                 # 5 big arrays + meta + stats (HBM)
    vmem_row_bytes = 20 * S + 1024              # lane-padded (.,8) meta/stats in VMEM
    # (d) double-buffered per-step VMEM <= ~10 MiB -> fits every generation's
    #     default scoped VMEM (v5e 16 MiB, v6e/v7x 32 MiB) with headroom.
    tb_cap = max(row_align,
                 ((10 << 20) // (2 * vmem_row_bytes)) // row_align * row_align)
    # (c) target >= ~2 MiB of HBM traffic per grid step.
    tb_tgt = min(tb_cap, _round_up(max(1, (2 << 20) // hbm_row_bytes), row_align))
    # (b) keep the "parallel" axis >= 2 steps for v7x's two TensorCores.
    min_tiles = 2 if B >= 64 else 1
    n_tiles = max(min_tiles, _cdiv(B, tb_tgt))
    # (a) minimize batch padding: split B as evenly as possible across steps.
    tb = min(tb_cap, _round_up(_cdiv(B, n_tiles), row_align))
    n_tiles = max(min_tiles, _cdiv(B, tb))
    return tb, n_tiles


def _loss_biaf_rl_kernel(zbits, use_col_stores,
                         sel_ref, pb_ref, pred_ref, sg_ref, sg1_ref,
                         meta_ref, stats_ref):
    """One batch tile.  meta columns: 0:len(f32, -1 on pad rows) 1:mp 2:logppl.
       stats columns: 0:z1 1:z2 2:z3 3:unk 4:rewards 5:ppl 6:sum_j(pb*wgt) 7:sum_j(wgt)."""
    TB, S = pb_ref.shape
    f32 = jnp.float32

    meta = meta_ref[...]                                  # (TB, 8) f32
    lens = meta[:, 0:1].astype(jnp.int32)                 # (TB, 1); -1 marks pad/OOB rows
    mp = meta[:, 1:2]
    logppl = meta[:, 2:3]

    col = lax.broadcasted_iota(jnp.int32, (TB, S), 1)
    lens_eff = jnp.minimum(lens, S)                       # never count past S (ref would OOB)
    mask_u = col < lens_eff                               # positions 0 .. len-1
    mask_z = jnp.logical_and(mask_u, col > 0)             # positions 1 .. len-1
    wcap = jnp.minimum(lens + 1, S)                       # loss-weight cap, 0 on pad rows
    mask_w = col < wcap

    # Native-dtype compares (no widening, no wrapper cast pass).
    pred = pred_ref[...]
    sg = sg_ref[...]
    sg1 = sg1_ref[...]

    d1 = pred != sg
    d2 = pred != sg1
    e3 = sg == sg1

    if zbits is not None:
        # Pack the three counts into one exact f32 lane reduction
        # (field capacity 2^zbits - 1 >= S - 1, total < 2^(3*zbits) <= 2^24).
        packed = (jnp.where(d1, f32(1.0), f32(0.0))
                  + jnp.where(d2, f32(1 << zbits), f32(0.0))
                  + jnp.where(e3, f32(1 << (2 * zbits)), f32(0.0)))
        packed = jnp.where(mask_z, packed, f32(0.0))
        zsum = jnp.sum(packed, axis=1, keepdims=True).astype(jnp.int32)
        field = (1 << zbits) - 1
        z1 = (zsum & field).astype(f32)
        z2 = ((zsum >> zbits) & field).astype(f32)
        z3 = (zsum >> (2 * zbits)).astype(f32)
    else:
        # Fallback for very long sequences: three separate f32 reductions.
        z1 = jnp.sum(jnp.where(jnp.logical_and(d1, mask_z), f32(1.0), f32(0.0)),
                     axis=1, keepdims=True)
        z2 = jnp.sum(jnp.where(jnp.logical_and(d2, mask_z), f32(1.0), f32(0.0)),
                     axis=1, keepdims=True)
        z3 = jnp.sum(jnp.where(jnp.logical_and(e3, mask_z), f32(1.0), f32(0.0)),
                     axis=1, keepdims=True)

    unk_cnt = jnp.sum(
        jnp.where(jnp.logical_and(sel_ref[...] == 0, mask_u), f32(1.0), f32(0.0)),
        axis=1, keepdims=True)
    inv_len = pl.reciprocal(jnp.maximum(lens.astype(f32), f32(1.0)), approx=False)
    unk = -unk_cnt * inv_len                              # 0 on pad rows (count is 0)

    valid = lens >= 0                                     # (TB,1): real batch rows only
    ppl = jnp.where(valid, -jnp.exp(logppl), f32(0.0))
    rewards = (mp * MP_REWARD_WEIGHT + ppl * PPL_REWARD_WEIGHT
               + z1 * Z1_REWARD_WEIGHT + z2 * Z2_REWARD_WEIGHT
               + z3 * Z3_REWARD_WEIGHT + unk * UNK_REWARD_WEIGHT) * 0.001
    rewards = jnp.where(valid, rewards, f32(0.0))

    # Per-row loss ingredients; bl is applied in the wrapper:
    #   loss = sum(-(rew-bl)*pbw) / sum(cnt)
    pbw = jnp.sum(jnp.where(mask_w, pb_ref[...], f32(0.0)), axis=1, keepdims=True)
    row_cnt = jnp.maximum(wcap, 0).astype(f32)            # = #j with wgt==1

    stats = (z1, z2, z3, unk, rewards, ppl, pbw, row_cnt)
    if use_col_stores:
        # Near-zero VALU: eight narrow column stores into the (TB,8) block.
        for k, v in enumerate(stats):
            stats_ref[:, k:k + 1] = v
    else:
        # Proven select-based assembly (fallback if column stores don't lower).
        cols8 = lax.broadcasted_iota(jnp.int32, (TB, 8), 1)
        acc = jnp.zeros((TB, 8), f32)
        for k, v in enumerate(stats):
            acc = acc + jnp.where(cols8 == k, v, f32(0.0))
        stats_ref[...] = acc


@partial(jax.jit, static_argnames=("tb", "n_tiles", "zbits", "use_col_stores"))
def _loss_biaf_rl_fused(sel, pb, predicted, sg, sg1, lens, mp, logppl, bl,
                        *, tb, n_tiles, zbits, use_col_stores):
    """Runs the batch-tiled Pallas kernel (no big-tensor pad/cast) and reduces
    to [loss, z1*W, z2*W, z3*W, mp*W, ppl*W, unk*W, mean(rewards)]."""
    B, S = pb.shape
    B_pad = tb * n_tiles

    pb = pb.astype(jnp.float32)          # no-op when already f32
    mp_f = mp.astype(jnp.float32).reshape(B)

    # Tiny (B_pad, 8) side input: col0=len (f32, -1 on pad rows), col1=mp, col2=logppl.
    meta = jnp.zeros((B_pad, 8), jnp.float32)
    meta = meta.at[:, 0].set(-1.0)
    meta = meta.at[:B, 0].set(lens.astype(jnp.float32).reshape(B))
    meta = meta.at[:B, 1].set(mp_f)
    meta = meta.at[:B, 2].set(logppl.astype(jnp.float32).reshape(B))

    big = lambda: pl.BlockSpec((tb, S), lambda i: (i, 0))   # last dim = full S
    small = lambda: pl.BlockSpec((tb, 8), lambda i: (i, 0))

    # The big (B,S) inputs are NOT padded: the last grid step may read past row
    # B (unspecified values), but those rows carry len=-1 in meta, so every
    # contribution is masked to zero and their output rows land in [B, B_pad).
    stats = pl.pallas_call(
        partial(_loss_biaf_rl_kernel, zbits, use_col_stores),
        out_shape=jax.ShapeDtypeStruct((B_pad, 8), jnp.float32),
        grid_spec=pltpu.PrefetchScalarGridSpec(
            num_scalar_prefetch=0,
            grid=(n_tiles,),
            in_specs=[
                big(),     # sel
                big(),     # pb
                big(),     # predicted
                big(),     # sudo_golden
                big(),     # sudo_golden_1
                small(),   # meta (len, mp, logppl)
            ],
            out_specs=small(),
        ),
        compiler_params=pltpu.CompilerParams(
            dimension_semantics=("parallel",)),
    )(sel, pb, predicted, sg, sg1, meta)

    v = stats[:B]                                          # valid rows only
    z1, z2, z3, unk = v[:, 0], v[:, 1], v[:, 2], v[:, 3]
    rew, ppl, pbw, cnt = v[:, 4], v[:, 5], v[:, 6], v[:, 7]

    loss = jnp.sum(-(rew - bl) * pbw) / jnp.sum(cnt)

    return jnp.stack([
        loss,
        jnp.mean(z1) * Z1_REWARD_WEIGHT,
        jnp.mean(z2) * Z2_REWARD_WEIGHT,
        jnp.mean(z3) * Z3_REWARD_WEIGHT,
        jnp.mean(mp_f) * MP_REWARD_WEIGHT,
        jnp.mean(ppl) * PPL_REWARD_WEIGHT,
        jnp.mean(unk) * UNK_REWARD_WEIGHT,
        jnp.mean(rew),                                     # for the baseline update
    ])


class LossBiafRLPallas:
    """Host-side wrapper mirroring LossBiafRL.forward() semantics."""

    def __init__(self, device=None, word_alphabet=None, vocab_size=None, port=None):
        self.bl = 0.0
        self.bn = 0
        self.device = device
        self.word_alphabet = word_alphabet
        self.vocab_size = vocab_size
        self.port = port
        self._use_col_stores = True   # flipped off if the column-store path can't lower

    def forward(self, sel, pb, predicted_out, golden_out, mask_id,
                stc_length_out, sudo_golden_out, sudo_golden_out_1,
                meaning_preservation, logppl):
        # TODO(synk): get_bertscore_ppl() talks to an external socket server;
        # meaning_preservation / logppl are supplied as inputs instead.
        B, S = pb.shape
        tb, n_tiles = _choose_tiling(B, S)
        zb = max(1, (S - 1).bit_length())
        zbits = zb if 3 * zb <= 24 else None

        args = (sel, pb, predicted_out, sudo_golden_out, sudo_golden_out_1,
                stc_length_out, meaning_preservation, logppl, jnp.float32(self.bl))
        try:
            summary = _loss_biaf_rl_fused(
                *args, tb=tb, n_tiles=n_tiles, zbits=zbits,
                use_col_stores=self._use_col_stores)
        except Exception:
            if not self._use_col_stores:
                raise
            # Lowering fallback: rebuild with the select-based stats assembly.
            self._use_col_stores = False
            summary = _loss_biaf_rl_fused(
                *args, tb=tb, n_tiles=n_tiles, zbits=zbits, use_col_stores=False)

        s = np.asarray(jax.device_get(summary))            # single host readback
        loss, z1w, z2w, z3w, mpw, pplw, unkw, rew_mean = (float(x) for x in s)

        self.bl = (self.bl * self.bn + rew_mean) / (self.bn + 1)
        self.bn += 1

        return (loss, z1w, z2w, z3w, mpw, pplw, unkw)


if __name__ == "__main__":
    key = jax.random.PRNGKey(0)
    B, S = 8, 16
    vocab_size = 32

    ks = jax.random.split(key, 9)
    sel = jax.random.randint(ks[0], (B, S), 0, vocab_size, dtype=jnp.int32)
    pb = -jax.random.uniform(ks[1], (B, S), jnp.float32, 0.1, 3.0)   # log-probs
    predicted_out = jax.random.randint(ks[2], (B, S), 0, 4, dtype=jnp.int32)
    sudo_golden_out = jax.random.randint(ks[3], (B, S), 0, 4, dtype=jnp.int32)
    sudo_golden_out_1 = jax.random.randint(ks[4], (B, S), 0, 4, dtype=jnp.int32)
    golden_out = jax.random.randint(ks[5], (B, S), 0, 4, dtype=jnp.int32)  # unused
    stc_length_out = jax.random.randint(ks[6], (B,), 2, S, dtype=jnp.int32)
    meaning_preservation = jax.random.uniform(ks[7], (B,), jnp.float32, 0.0, 1.0)
    logppl = jax.random.uniform(ks[8], (B,), jnp.float32, 0.5, 2.0)
    mask_id = None  # unused in the reference forward()

    loss_mod = LossBiafRLPallas(vocab_size=vocab_size)
    result = loss_mod.forward(sel, pb, predicted_out, golden_out, mask_id,
                              stc_length_out, sudo_golden_out,
                              sudo_golden_out_1, meaning_preservation, logppl)
    jax.block_until_ready(jnp.asarray(result, dtype=jnp.float32))
    print("KERNEL_OK")
</pallas_src>

<mosaic_0001>
module attributes {stable_mosaic.version = 11 : i64} {
  func.func @_loss_biaf_rl_kernel(%arg0: i32, %arg1: memref<8x16xi32, #tpu.memory_space<vmem>>, %arg2: memref<8x16xf32, #tpu.memory_space<vmem>>, %arg3: memref<8x16xi32, #tpu.memory_space<vmem>>, %arg4: memref<8x16xi32, #tpu.memory_space<vmem>>, %arg5: memref<8x16xi32, #tpu.memory_space<vmem>>, %arg6: memref<8x8xf32, #tpu.memory_space<vmem>>, %arg7: memref<8x8xf32, #tpu.memory_space<vmem>>) attributes {dimension_semantics = [#tpu.dimension_semantics<parallel>], iteration_bounds = array<i64: 1>, scalar_prefetch = 0 : i64, scratch_operands = 0 : i64, tpu.core_type = #tpu.core_type<tc>, window_params = [{transform_indices = @transform_0, window_bounds = array<i64: 8, 16>}, {transform_indices = @transform_1, window_bounds = array<i64: 8, 16>}, {transform_indices = @transform_2, window_bounds = array<i64: 8, 16>}, {transform_indices = @transform_3, window_bounds = array<i64: 8, 16>}, {transform_indices = @transform_4, window_bounds = array<i64: 8, 16>}, {transform_indices = @transform_5, window_bounds = array<i64: 8, 8>}, {transform_indices = @transform_6, window_bounds = array<i64: 8, 8>}]} {
    %c0 = arith.constant 0 : index
    %c0_0 = arith.constant 0 : index
    %0 = vector.load %arg6[%c0, %c0_0] : memref<8x8xf32, #tpu.memory_space<vmem>>, vector<8x8xf32>
    %1 = vector.extract_strided_slice %0 {offsets = [0, 0], sizes = [8, 1], strides = [1, 1]} : vector<8x8xf32> to vector<8x1xf32>
    %2 = arith.fptosi %1 : vector<8x1xf32> to vector<8x1xi32>
    %3 = vector.extract_strided_slice %0 {offsets = [0, 1], sizes = [8, 1], strides = [1, 1]} : vector<8x8xf32> to vector<8x1xf32>
    %4 = vector.extract_strided_slice %0 {offsets = [0, 2], sizes = [8, 1], strides = [1, 1]} : vector<8x8xf32> to vector<8x1xf32>
    %5 = tpu.iota {dimensions = array<i32: 1>} : vector<8x16xi32>
    %c16_i32 = arith.constant 16 : i32
    %6 = vector.broadcast %c16_i32 : i32 to vector<8x1xi32>
    %7 = arith.minsi %2, %6 : vector<8x1xi32>
    %8 = vector.broadcast %7 : vector<8x1xi32> to vector<8x16xi32>
    %9 = arith.cmpi slt, %5, %8 : vector<8x16xi32>
    %c0_i32 = arith.constant 0 : i32
    %10 = vector.broadcast %c0_i32 : i32 to vector<8x16xi32>
    %11 = arith.cmpi sgt, %5, %10 : vector<8x16xi32>
    %12 = arith.andi %9, %11 : vector<8x16xi1>
    %c1_i32 = arith.constant 1 : i32
    %13 = vector.broadcast %c1_i32 : i32 to vector<8x1xi32>
    %14 = arith.addi %2, %13 : vector<8x1xi32>
    %c16_i32_1 = arith.constant 16 : i32
    %15 = vector.broadcast %c16_i32_1 : i32 to vector<8x1xi32>
    %16 = arith.minsi %14, %15 : vector<8x1xi32>
    %17 = vector.broadcast %16 : vector<8x1xi32> to vector<8x16xi32>
    %18 = arith.cmpi slt, %5, %17 : vector<8x16xi32>
    %c0_2 = arith.constant 0 : index
    %c0_3 = arith.constant 0 : index
    %19 = vector.load %arg3[%c0_2, %c0_3] : memref<8x16xi32, #tpu.memory_space<vmem>>, vector<8x16xi32>
    %c0_4 = arith.constant 0 : index
    %c0_5 = arith.constant 0 : index
    %20 = vector.load %arg4[%c0_4, %c0_5] : memref<8x16xi32, #tpu.memory_space<vmem>>, vector<8x16xi32>
    %c0_6 = arith.constant 0 : index
    %c0_7 = arith.constant 0 : index
    %21 = vector.load %arg5[%c0_6, %c0_7] : memref<8x16xi32, #tpu.memory_space<vmem>>, vector<8x16xi32>
    %22 = arith.cmpi ne, %19, %20 : vector<8x16xi32>
    %23 = arith.cmpi ne, %19, %21 : vector<8x16xi32>
    %24 = arith.cmpi eq, %20, %21 : vector<8x16xi32>
    %cst = arith.constant 1.000000e+00 : f32
    %cst_8 = arith.constant 0.000000e+00 : f32
    %25 = vector.broadcast %cst : f32 to vector<8x16xf32>
    %26 = vector.broadcast %cst_8 : f32 to vector<8x16xf32>
    %27 = arith.select %22, %25, %26 : vector<8x16xi1>, vector<8x16xf32>
    %cst_9 = arith.constant 1.600000e+01 : f32
    %cst_10 = arith.constant 0.000000e+00 : f32
    %28 = vector.broadcast %cst_9 : f32 to vector<8x16xf32>
    %29 = vector.broadcast %cst_10 : f32 to vector<8x16xf32>
    %30 = arith.select %23, %28, %29 : vector<8x16xi1>, vector<8x16xf32>
    %31 = arith.addf %27, %30 : vector<8x16xf32>
    %cst_11 = arith.constant 2.560000e+02 : f32
    %cst_12 = arith.constant 0.000000e+00 : f32
    %32 = vector.broadcast %cst_11 : f32 to vector<8x16xf32>
    %33 = vector.broadcast %cst_12 : f32 to vector<8x16xf32>
    %34 = arith.select %24, %32, %33 : vector<8x16xi1>, vector<8x16xf32>
    %35 = arith.addf %31, %34 : vector<8x16xf32>
    %cst_13 = arith.constant 0.000000e+00 : f32
    %36 = vector.broadcast %cst_13 : f32 to vector<8x16xf32>
    %37 = arith.select %12, %35, %36 : vector<8x16xi1>, vector<8x16xf32>
    %cst_14 = arith.constant dense<0.000000e+00> : vector<8xf32>
    %38 = vector.multi_reduction <add>, %37, %cst_14 [1] : vector<8x16xf32> to vector<8xf32>
    %39 = vector.shape_cast %38 : vector<8xf32> to vector<8x1xf32>
    %40 = arith.fptosi %39 : vector<8x1xf32> to vector<8x1xi32>
    %c15_i32 = arith.constant 15 : i32
    %41 = vector.broadcast %c15_i32 : i32 to vector<8x1xi32>
    %42 = arith.andi %40, %41 : vector<8x1xi32>
    %43 = arith.sitofp %42 : vector<8x1xi32> to vector<8x1xf32>
    %c4_i32 = arith.constant 4 : i32
    %44 = vector.broadcast %c4_i32 : i32 to vector<8x1xi32>
    %45 = arith.shrsi %40, %44 : vector<8x1xi32>
    %c15_i32_15 = arith.constant 15 : i32
    %46 = vector.broadcast %c15_i32_15 : i32 to vector<8x1xi32>
    %47 = arith.andi %45, %46 : vector<8x1xi32>
    %48 = arith.sitofp %47 : vector<8x1xi32> to vector<8x1xf32>
    %c8_i32 = arith.constant 8 : i32
    %49 = vector.broadcast %c8_i32 : i32 to vector<8x1xi32>
    %50 = arith.shrsi %40, %49 : vector<8x1xi32>
    %51 = arith.sitofp %50 : vector<8x1xi32> to vector<8x1xf32>
    %c0_16 = arith.constant 0 : index
    %c0_17 = arith.constant 0 : index
    %52 = vector.load %arg1[%c0_16, %c0_17] : memref<8x16xi32, #tpu.memory_space<vmem>>, vector<8x16xi32>
    %c0_i32_18 = arith.constant 0 : i32
    %53 = vector.broadcast %c0_i32_18 : i32 to vector<8x16xi32>
    %54 = arith.cmpi eq, %52, %53 : vector<8x16xi32>
    %55 = arith.andi %54, %9 : vector<8x16xi1>
    %cst_19 = arith.constant 1.000000e+00 : f32
    %cst_20 = arith.constant 0.000000e+00 : f32
    %56 = vector.broadcast %cst_19 : f32 to vector<8x16xf32>
    %57 = vector.broadcast %cst_20 : f32 to vector<8x16xf32>
    %58 = arith.select %55, %56, %57 : vector<8x16xi1>, vector<8x16xf32>
    %cst_21 = arith.constant dense<0.000000e+00> : vector<8xf32>
    %59 = vector.multi_reduction <add>, %58, %cst_21 [1] : vector<8x16xf32> to vector<8xf32>
    %60 = vector.shape_cast %59 : vector<8xf32> to vector<8x1xf32>
    %61 = arith.sitofp %2 : vector<8x1xi32> to vector<8x1xf32>
    %cst_22 = arith.constant 1.000000e+00 : f32
    %62 = vector.broadcast %cst_22 : f32 to vector<8x1xf32>
    %63 = arith.maximumf %61, %62 : vector<8x1xf32>
    %64 = tpu.reciprocal %63 : vector<8x1xf32> -> vector<8x1xf32>
    %cst_23 = arith.constant 0.000000e+00 : f32
    %65 = vector.broadcast %cst_23 : f32 to vector<8x1xf32>
    %66 = arith.subf %65, %60 : vector<8x1xf32>
    %67 = arith.mulf %66, %64 : vector<8x1xf32>
    %c0_i32_24 = arith.constant 0 : i32
    %68 = vector.broadcast %c0_i32_24 : i32 to vector<8x1xi32>
    %69 = arith.cmpi sge, %2, %68 : vector<8x1xi32>
    %70 = math.exp %4 : vector<8x1xf32>
    %cst_25 = arith.constant 0.000000e+00 : f32
    %71 = vector.broadcast %cst_25 : f32 to vector<8x1xf32>
    %72 = arith.subf %71, %70 : vector<8x1xf32>
    %cst_26 = arith.constant 0.000000e+00 : f32
    %73 = vector.broadcast %cst_26 : f32 to vector<8x1xf32>
    %74 = arith.select %69, %72, %73 : vector<8x1xi1>, vector<8x1xf32>
    %cst_27 = arith.constant 1.000000e+00 : f32
    %75 = vector.broadcast %cst_27 : f32 to vector<8x1xf32>
    %76 = arith.mulf %3, %75 : vector<8x1xf32>
    %cst_28 = arith.constant 5.000000e-01 : f32
    %77 = vector.broadcast %cst_28 : f32 to vector<8x1xf32>
    %78 = arith.mulf %74, %77 : vector<8x1xf32>
    %79 = arith.addf %76, %78 : vector<8x1xf32>
    %cst_29 = arith.constant 2.000000e+00 : f32
    %80 = vector.broadcast %cst_29 : f32 to vector<8x1xf32>
    %81 = arith.mulf %43, %80 : vector<8x1xf32>
    %82 = arith.addf %79, %81 : vector<8x1xf32>
    %cst_30 = arith.constant 2.000000e+00 : f32
    %83 = vector.broadcast %cst_30 : f32 to vector<8x1xf32>
    %84 = arith.mulf %48, %83 : vector<8x1xf32>
    %85 = arith.addf %82, %84 : vector<8x1xf32>
    %cst_31 = arith.constant 1.500000e+00 : f32
    %86 = vector.broadcast %cst_31 : f32 to vector<8x1xf32>
    %87 = arith.mulf %51, %86 : vector<8x1xf32>
    %88 = arith.addf %85, %87 : vector<8x1xf32>
    %cst_32 = arith.constant 3.000000e+00 : f32
    %89 = vector.broadcast %cst_32 : f32 to vector<8x1xf32>
    %90 = arith.mulf %67, %89 : vector<8x1xf32>
    %91 = arith.addf %88, %90 : vector<8x1xf32>
    %cst_33 = arith.constant 1.000000e-03 : f32
    %92 = vector.broadcast %cst_33 : f32 to vector<8x1xf32>
    %93 = arith.mulf %91, %92 : vector<8x1xf32>
    %cst_34 = arith.constant 0.000000e+00 : f32
    %94 = vector.broadcast %cst_34 : f32 to vector<8x1xf32>
    %95 = arith.select %69, %93, %94 : vector<8x1xi1>, vector<8x1xf32>
    %c0_35 = arith.constant 0 : index
    %c0_36 = arith.constant 0 : index
    %96 = vector.load %arg2[%c0_35, %c0_36] : memref<8x16xf32, #tpu.memory_space<vmem>>, vector<8x16xf32>
    %cst_37 = arith.constant 0.000000e+00 : f32
    %97 = vector.broadcast %cst_37 : f32 to vector<8x16xf32>
    %98 = arith.select %18, %96, %97 : vector<8x16xi1>, vector<8x16xf32>
    %cst_38 = arith.constant dense<0.000000e+00> : vector<8xf32>
    %99 = vector.multi_reduction <add>, %98, %cst_38 [1] : vector<8x16xf32> to vector<8xf32>
    %100 = vector.shape_cast %99 : vector<8xf32> to vector<8x1xf32>
    %c0_i32_39 = arith.constant 0 : i32
    %101 = vector.broadcast %c0_i32_39 : i32 to vector<8x1xi32>
    %102 = arith.maxsi %16, %101 : vector<8x1xi32>
    %103 = arith.sitofp %102 : vector<8x1xi32> to vector<8x1xf32>
    %c0_40 = arith.constant 0 : index
    %c0_41 = arith.constant 0 : index
    %104 = vector.load %arg7[%c0_40, %c0_41] : memref<8x8xf32, #tpu.memory_space<vmem>>, vector<8x1xf32>
    tpu.vector_store %arg7[%c0_40, %c0_41], %43 {strides = array<i32>} : memref<8x8xf32, #tpu.memory_space<vmem>>, vector<8x1xf32>,
    %c0_42 = arith.constant 0 : index
    %c1 = arith.constant 1 : index
    %105 = vector.load %arg7[%c0_42, %c1] : memref<8x8xf32, #tpu.memory_space<vmem>>, vector<8x1xf32>
    tpu.vector_store %arg7[%c0_42, %c1], %48 {strides = array<i32>} : memref<8x8xf32, #tpu.memory_space<vmem>>, vector<8x1xf32>,
    %c0_43 = arith.constant 0 : index
    %c2 = arith.constant 2 : index
    %106 = vector.load %arg7[%c0_43, %c2] : memref<8x8xf32, #tpu.memory_space<vmem>>, vector<8x1xf32>
    tpu.vector_store %arg7[%c0_43, %c2], %51 {strides = array<i32>} : memref<8x8xf32, #tpu.memory_space<vmem>>, vector<8x1xf32>,
    %c0_44 = arith.constant 0 : index
    %c3 = arith.constant 3 : index
    %107 = vector.load %arg7[%c0_44, %c3] : memref<8x8xf32, #tpu.memory_space<vmem>>, vector<8x1xf32>
    tpu.vector_store %arg7[%c0_44, %c3], %67 {strides = array<i32>} : memref<8x8xf32, #tpu.memory_space<vmem>>, vector<8x1xf32>,
    %c0_45 = arith.constant 0 : index
    %c4 = arith.constant 4 : index
    %108 = vector.load %arg7[%c0_45, %c4] : memref<8x8xf32, #tpu.memory_space<vmem>>, vector<8x1xf32>
    tpu.vector_store %arg7[%c0_45, %c4], %95 {strides = array<i32>} : memref<8x8xf32, #tpu.memory_space<vmem>>, vector<8x1xf32>,
    %c0_46 = arith.constant 0 : index
    %c5 = arith.constant 5 : index
    %109 = vector.load %arg7[%c0_46, %c5] : memref<8x8xf32, #tpu.memory_space<vmem>>, vector<8x1xf32>
    tpu.vector_store %arg7[%c0_46, %c5], %74 {strides = array<i32>} : memref<8x8xf32, #tpu.memory_space<vmem>>, vector<8x1xf32>,
    %c0_47 = arith.constant 0 : index
    %c6 = arith.constant 6 : index
    %110 = vector.load %arg7[%c0_47, %c6] : memref<8x8xf32, #tpu.memory_space<vmem>>, vector<8x1xf32>
    tpu.vector_store %arg7[%c0_47, %c6], %100 {strides = array<i32>} : memref<8x8xf32, #tpu.memory_space<vmem>>, vector<8x1xf32>,
    %c0_48 = arith.constant 0 : index
    %c7 = arith.constant 7 : index
    %111 = vector.load %arg7[%c0_48, %c7] : memref<8x8xf32, #tpu.memory_space<vmem>>, vector<8x1xf32>
    tpu.vector_store %arg7[%c0_48, %c7], %103 {strides = array<i32>} : memref<8x8xf32, #tpu.memory_space<vmem>>, vector<8x1xf32>,
    return
  }
  func.func @transform_0(%arg0: i32) -> (i32, i32) {
    %c0_i32 = arith.constant 0 : i32
    %c0_i32_0 = arith.constant 0 : i32
    return %arg0, %c0_i32 : i32, i32
  }
  func.func @transform_1(%arg0: i32) -> (i32, i32) {
    %c0_i32 = arith.constant 0 : i32
    %c0_i32_0 = arith.constant 0 : i32
    return %arg0, %c0_i32 : i32, i32
  }
  func.func @transform_2(%arg0: i32) -> (i32, i32) {
    %c0_i32 = arith.constant 0 : i32
    %c0_i32_0 = arith.constant 0 : i32
    return %arg0, %c0_i32 : i32, i32
  }
  func.func @transform_3(%arg0: i32) -> (i32, i32) {
    %c0_i32 = arith.constant 0 : i32
    %c0_i32_0 = arith.constant 0 : i32
    return %arg0, %c0_i32 : i32, i32
  }
  func.func @transform_4(%arg0: i32) -> (i32, i32) {
    %c0_i32 = arith.constant 0 : i32
    %c0_i32_0 = arith.constant 0 : i32
    return %arg0, %c0_i32 : i32, i32
  }
  func.func @transform_5(%arg0: i32) -> (i32, i32) {
    %c0_i32 = arith.constant 0 : i32
    %c0_i32_0 = arith.constant 0 : i32
    return %arg0, %c0_i32 : i32, i32
  }
  func.func @transform_6(%arg0: i32) -> (i32, i32) {
    %c0_i32 = arith.constant 0 : i32
    %c0_i32_0 = arith.constant 0 : i32
    return %arg0, %c0_i32 : i32, i32
  }
}

module attributes {stable_mosaic.version = 11 : i64} {
  func.func @_loss_biaf_rl_kernel(%arg0: i32, %arg1: memref<8x16xi32, #tpu.memory_space<vmem>>, %arg2: memref<8x16xf32, #tpu.memory_space<vmem>>, %arg3: memref<8x16xi32, #tpu.memory_space<vmem>>, %arg4: memref<8x16xi32, #tpu.memory_space<vmem>>, %arg5: memref<8x16xi32, #tpu.memory_space<vmem>>, %arg6: memref<8x8xf32, #tpu.memory_space<vmem>>, %arg7: memref<8x8xf32, #tpu.memory_space<vmem>>) attributes {dimension_semantics = [#tpu.dimension_semantics<parallel>], iteration_bounds = array<i64: 1>, scalar_prefetch = 0 : i64, scratch_operands = 0 : i64, tpu.core_type = #tpu.core_type<tc>, window_params = [{transform_indices = @transform_0, window_bounds = array<i64: 8, 16>}, {transform_indices = @transform_1, window_bounds = array<i64: 8, 16>}, {transform_indices = @transform_2, window_bounds = array<i64: 8, 16>}, {transform_indices = @transform_3, window_bounds = array<i64: 8, 16>}, {transform_indices = @transform_4, window_bounds = array<i64: 8, 16>}, {transform_indices = @transform_5, window_bounds = array<i64: 8, 8>}, {transform_indices = @transform_6, window_bounds = array<i64: 8, 8>}]} {
    %c0 = arith.constant 0 : index
    %c0_0 = arith.constant 0 : index
    %0 = vector.load %arg6[%c0, %c0_0] : memref<8x8xf32, #tpu.memory_space<vmem>>, vector<8x8xf32>
    %1 = vector.extract_strided_slice %0 {offsets = [0, 0], sizes = [8, 1], strides = [1, 1]} : vector<8x8xf32> to vector<8x1xf32>
    %2 = arith.fptosi %1 : vector<8x1xf32> to vector<8x1xi32>
    %3 = vector.extract_strided_slice %0 {offsets = [0, 1], sizes = [8, 1], strides = [1, 1]} : vector<8x8xf32> to vector<8x1xf32>
    %4 = vector.extract_strided_slice %0 {offsets = [0, 2], sizes = [8, 1], strides = [1, 1]} : vector<8x8xf32> to vector<8x1xf32>
    %5 = tpu.iota {dimensions = array<i32: 1>} : vector<8x16xi32>
    %c16_i32 = arith.constant 16 : i32
    %6 = vector.broadcast %c16_i32 : i32 to vector<8x1xi32>
    %7 = arith.minsi %2, %6 : vector<8x1xi32>
    %8 = vector.broadcast %7 : vector<8x1xi32> to vector<8x16xi32>
    %9 = arith.cmpi slt, %5, %8 : vector<8x16xi32>
    %c0_i32 = arith.constant 0 : i32
    %10 = vector.broadcast %c0_i32 : i32 to vector<8x16xi32>
    %11 = arith.cmpi sgt, %5, %10 : vector<8x16xi32>
    %12 = arith.andi %9, %11 : vector<8x16xi1>
    %c1_i32 = arith.constant 1 : i32
    %13 = vector.broadcast %c1_i32 : i32 to vector<8x1xi32>
    %14 = arith.addi %2, %13 : vector<8x1xi32>
    %c16_i32_1 = arith.constant 16 : i32
    %15 = vector.broadcast %c16_i32_1 : i32 to vector<8x1xi32>
    %16 = arith.minsi %14, %15 : vector<8x1xi32>
    %17 = vector.broadcast %16 : vector<8x1xi32> to vector<8x16xi32>
    %18 = arith.cmpi slt, %5, %17 : vector<8x16xi32>
    %c0_2 = arith.constant 0 : index
    %c0_3 = arith.constant 0 : index
    %19 = vector.load %arg3[%c0_2, %c0_3] : memref<8x16xi32, #tpu.memory_space<vmem>>, vector<8x16xi32>
    %c0_4 = arith.constant 0 : index
    %c0_5 = arith.constant 0 : index
    %20 = vector.load %arg4[%c0_4, %c0_5] : memref<8x16xi32, #tpu.memory_space<vmem>>, vector<8x16xi32>
    %c0_6 = arith.constant 0 : index
    %c0_7 = arith.constant 0 : index
    %21 = vector.load %arg5[%c0_6, %c0_7] : memref<8x16xi32, #tpu.memory_space<vmem>>, vector<8x16xi32>
    %22 = arith.cmpi ne, %19, %20 : vector<8x16xi32>
    %23 = arith.cmpi ne, %19, %21 : vector<8x16xi32>
    %24 = arith.cmpi eq, %20, %21 : vector<8x16xi32>
    %cst = arith.constant 1.000000e+00 : f32
    %cst_8 = arith.constant 0.000000e+00 : f32
    %25 = vector.broadcast %cst : f32 to vector<8x16xf32>
    %26 = vector.broadcast %cst_8 : f32 to vector<8x16xf32>
    %27 = arith.select %22, %25, %26 : vector<8x16xi1>, vector<8x16xf32>
    %cst_9 = arith.constant 1.600000e+01 : f32
    %cst_10 = arith.constant 0.000000e+00 : f32
    %28 = vector.broadcast %cst_9 : f32 to vector<8x16xf32>
    %29 = vector.broadcast %cst_10 : f32 to vector<8x16xf32>
    %30 = arith.select %23, %28, %29 : vector<8x16xi1>, vector<8x16xf32>
    %31 = arith.addf %27, %30 : vector<8x16xf32>
    %cst_11 = arith.constant 2.560000e+02 : f32
    %cst_12 = arith.constant 0.000000e+00 : f32
    %32 = vector.broadcast %cst_11 : f32 to vector<8x16xf32>
    %33 = vector.broadcast %cst_12 : f32 to vector<8x16xf32>
    %34 = arith.select %24, %32, %33 : vector<8x16xi1>, vector<8x16xf32>
    %35 = arith.addf %31, %34 : vector<8x16xf32>
    %cst_13 = arith.constant 0.000000e+00 : f32
    %36 = vector.broadcast %cst_13 : f32 to vector<8x16xf32>
    %37 = arith.select %12, %35, %36 : vector<8x16xi1>, vector<8x16xf32>
    %cst_14 = arith.constant dense<0.000000e+00> : vector<8xf32>
    %38 = vector.multi_reduction <add>, %37, %cst_14 [1] : vector<8x16xf32> to vector<8xf32>
    %39 = vector.shape_cast %38 : vector<8xf32> to vector<8x1xf32>
    %40 = arith.fptosi %39 : vector<8x1xf32> to vector<8x1xi32>
    %c15_i32 = arith.constant 15 : i32
    %41 = vector.broadcast %c15_i32 : i32 to vector<8x1xi32>
    %42 = arith.andi %40, %41 : vector<8x1xi32>
    %43 = arith.sitofp %42 : vector<8x1xi32> to vector<8x1xf32>
    %c4_i32 = arith.constant 4 : i32
    %44 = vector.broadcast %c4_i32 : i32 to vector<8x1xi32>
    %45 = arith.shrsi %40, %44 : vector<8x1xi32>
    %c15_i32_15 = arith.constant 15 : i32
    %46 = vector.broadcast %c15_i32_15 : i32 to vector<8x1xi32>
    %47 = arith.andi %45, %46 : vector<8x1xi32>
    %48 = arith.sitofp %47 : vector<8x1xi32> to vector<8x1xf32>
    %c8_i32 = arith.constant 8 : i32
    %49 = vector.broadcast %c8_i32 : i32 to vector<8x1xi32>
    %50 = arith.shrsi %40, %49 : vector<8x1xi32>
    %51 = arith.sitofp %50 : vector<8x1xi32> to vector<8x1xf32>
    %c0_16 = arith.constant 0 : index
    %c0_17 = arith.constant 0 : index
    %52 = vector.load %arg1[%c0_16, %c0_17] : memref<8x16xi32, #tpu.memory_space<vmem>>, vector<8x16xi32>
    %c0_i32_18 = arith.constant 0 : i32
    %53 = vector.broadcast %c0_i32_18 : i32 to vector<8x16xi32>
    %54 = arith.cmpi eq, %52, %53 : vector<8x16xi32>
    %55 = arith.andi %54, %9 : vector<8x16xi1>
    %cst_19 = arith.constant 1.000000e+00 : f32
    %cst_20 = arith.constant 0.000000e+00 : f32
    %56 = vector.broadcast %cst_19 : f32 to vector<8x16xf32>
    %57 = vector.broadcast %cst_20 : f32 to vector<8x16xf32>
    %58 = arith.select %55, %56, %57 : vector<8x16xi1>, vector<8x16xf32>
    %cst_21 = arith.constant dense<0.000000e+00> : vector<8xf32>
    %59 = vector.multi_reduction <add>, %58, %cst_21 [1] : vector<8x16xf32> to vector<8xf32>
    %60 = vector.shape_cast %59 : vector<8xf32> to vector<8x1xf32>
    %61 = arith.sitofp %2 : vector<8x1xi32> to vector<8x1xf32>
    %cst_22 = arith.constant 1.000000e+00 : f32
    %62 = vector.broadcast %cst_22 : f32 to vector<8x1xf32>
    %63 = arith.maximumf %61, %62 : vector<8x1xf32>
    %64 = tpu.reciprocal %63 : vector<8x1xf32> -> vector<8x1xf32>
    %cst_23 = arith.constant 0.000000e+00 : f32
    %65 = vector.broadcast %cst_23 : f32 to vector<8x1xf32>
    %66 = arith.subf %65, %60 : vector<8x1xf32>
    %67 = arith.mulf %66, %64 : vector<8x1xf32>
    %c0_i32_24 = arith.constant 0 : i32
    %68 = vector.broadcast %c0_i32_24 : i32 to vector<8x1xi32>
    %69 = arith.cmpi sge, %2, %68 : vector<8x1xi32>
    %70 = math.exp %4 : vector<8x1xf32>
    %cst_25 = arith.constant 0.000000e+00 : f32
    %71 = vector.broadcast %cst_25 : f32 to vector<8x1xf32>
    %72 = arith.subf %71, %70 : vector<8x1xf32>
    %cst_26 = arith.constant 0.000000e+00 : f32
    %73 = vector.broadcast %cst_26 : f32 to vector<8x1xf32>
    %74 = arith.select %69, %72, %73 : vector<8x1xi1>, vector<8x1xf32>
    %cst_27 = arith.constant 1.000000e+00 : f32
    %75 = vector.broadcast %cst_27 : f32 to vector<8x1xf32>
    %76 = arith.mulf %3, %75 : vector<8x1xf32>
    %cst_28 = arith.constant 5.000000e-01 : f32
    %77 = vector.broadcast %cst_28 : f32 to vector<8x1xf32>
    %78 = arith.mulf %74, %77 : vector<8x1xf32>
    %79 = arith.addf %76, %78 : vector<8x1xf32>
    %cst_29 = arith.constant 2.000000e+00 : f32
    %80 = vector.broadcast %cst_29 : f32 to vector<8x1xf32>
    %81 = arith.mulf %43, %80 : vector<8x1xf32>
    %82 = arith.addf %79, %81 : vector<8x1xf32>
    %cst_30 = arith.constant 2.000000e+00 : f32
    %83 = vector.broadcast %cst_30 : f32 to vector<8x1xf32>
    %84 = arith.mulf %48, %83 : vector<8x1xf32>
    %85 = arith.addf %82, %84 : vector<8x1xf32>
    %cst_31 = arith.constant 1.500000e+00 : f32
    %86 = vector.broadcast %cst_31 : f32 to vector<8x1xf32>
    %87 = arith.mulf %51, %86 : vector<8x1xf32>
    %88 = arith.addf %85, %87 : vector<8x1xf32>
    %cst_32 = arith.constant 3.000000e+00 : f32
    %89 = vector.broadcast %cst_32 : f32 to vector<8x1xf32>
    %90 = arith.mulf %67, %89 : vector<8x1xf32>
    %91 = arith.addf %88, %90 : vector<8x1xf32>
    %cst_33 = arith.constant 1.000000e-03 : f32
    %92 = vector.broadcast %cst_33 : f32 to vector<8x1xf32>
    %93 = arith.mulf %91, %92 : vector<8x1xf32>
    %cst_34 = arith.constant 0.000000e+00 : f32
    %94 = vector.broadcast %cst_34 : f32 to vector<8x1xf32>
    %95 = arith.select %69, %93, %94 : vector<8x1xi1>, vector<8x1xf32>
    %c0_35 = arith.constant 0 : index
    %c0_36 = arith.constant 0 : index
    %96 = vector.load %arg2[%c0_35, %c0_36] : memref<8x16xf32, #tpu.memory_space<vmem>>, vector<8x16xf32>
    %cst_37 = arith.constant 0.000000e+00 : f32
    %97 = vector.broadcast %cst_37 : f32 to vector<8x16xf32>
    %98 = arith.select %18, %96, %97 : vector<8x16xi1>, vector<8x16xf32>
    %cst_38 = arith.constant dense<0.000000e+00> : vector<8xf32>
    %99 = vector.multi_reduction <add>, %98, %cst_38 [1] : vector<8x16xf32> to vector<8xf32>
    %100 = vector.shape_cast %99 : vector<8xf32> to vector<8x1xf32>
    %c0_i32_39 = arith.constant 0 : i32
    %101 = vector.broadcast %c0_i32_39 : i32 to vector<8x1xi32>
    %102 = arith.maxsi %16, %101 : vector<8x1xi32>
    %103 = arith.sitofp %102 : vector<8x1xi32> to vector<8x1xf32>
    %104 = tpu.iota {dimensions = array<i32: 1>} : vector<8x8xi32>
    %cst_40 = arith.constant 0.000000e+00 : f32
    %105 = vector.broadcast %cst_40 : f32 to vector<8x8xf32>
    %c0_i32_41 = arith.constant 0 : i32
    %106 = vector.broadcast %c0_i32_41 : i32 to vector<8x8xi32>
    %107 = arith.cmpi eq, %104, %106 : vector<8x8xi32>
    %cst_42 = arith.constant 0.000000e+00 : f32
    %108 = vector.shape_cast %43 : vector<8x1xf32> to vector<8x1xf32>
    %109 = vector.broadcast %108 : vector<8x1xf32> to vector<8x8xf32>
    %110 = vector.broadcast %cst_42 : f32 to vector<8x8xf32>
    %111 = arith.select %107, %109, %110 : vector<8x8xi1>, vector<8x8xf32>
    %112 = arith.addf %105, %111 : vector<8x8xf32>
    %c1_i32_43 = arith.constant 1 : i32
    %113 = vector.broadcast %c1_i32_43 : i32 to vector<8x8xi32>
    %114 = arith.cmpi eq, %104, %113 : vector<8x8xi32>
    %cst_44 = arith.constant 0.000000e+00 : f32
    %115 = vector.shape_cast %48 : vector<8x1xf32> to vector<8x1xf32>
    %116 = vector.broadcast %115 : vector<8x1xf32> to vector<8x8xf32>
    %117 = vector.broadcast %cst_44 : f32 to vector<8x8xf32>
    %118 = arith.select %114, %116, %117 : vector<8x8xi1>, vector<8x8xf32>
    %119 = arith.addf %112, %118 : vector<8x8xf32>
    %c2_i32 = arith.constant 2 : i32
    %120 = vector.broadcast %c2_i32 : i32 to vector<8x8xi32>
    %121 = arith.cmpi eq, %104, %120 : vector<8x8xi32>
    %cst_45 = arith.constant 0.000000e+00 : f32
    %122 = vector.shape_cast %51 : vector<8x1xf32> to vector<8x1xf32>
    %123 = vector.broadcast %122 : vector<8x1xf32> to vector<8x8xf32>
    %124 = vector.broadcast %cst_45 : f32 to vector<8x8xf32>
    %125 = arith.select %121, %123, %124 : vector<8x8xi1>, vector<8x8xf32>
    %126 = arith.addf %119, %125 : vector<8x8xf32>
    %c3_i32 = arith.constant 3 : i32
    %127 = vector.broadcast %c3_i32 : i32 to vector<8x8xi32>
    %128 = arith.cmpi eq, %104, %127 : vector<8x8xi32>
    %cst_46 = arith.constant 0.000000e+00 : f32
    %129 = vector.shape_cast %67 : vector<8x1xf32> to vector<8x1xf32>
    %130 = vector.broadcast %129 : vector<8x1xf32> to vector<8x8xf32>
    %131 = vector.broadcast %cst_46 : f32 to vector<8x8xf32>
    %132 = arith.select %128, %130, %131 : vector<8x8xi1>, vector<8x8xf32>
    %133 = arith.addf %126, %132 : vector<8x8xf32>
    %c4_i32_47 = arith.constant 4 : i32
    %134 = vector.broadcast %c4_i32_47 : i32 to vector<8x8xi32>
    %135 = arith.cmpi eq, %104, %134 : vector<8x8xi32>
    %cst_48 = arith.constant 0.000000e+00 : f32
    %136 = vector.shape_cast %95 : vector<8x1xf32> to vector<8x1xf32>
    %137 = vector.broadcast %136 : vector<8x1xf32> to vector<8x8xf32>
    %138 = vector.broadcast %cst_48 : f32 to vector<8x8xf32>
    %139 = arith.select %135, %137, %138 : vector<8x8xi1>, vector<8x8xf32>
    %140 = arith.addf %133, %139 : vector<8x8xf32>
    %c5_i32 = arith.constant 5 : i32
    %141 = vector.broadcast %c5_i32 : i32 to vector<8x8xi32>
    %142 = arith.cmpi eq, %104, %141 : vector<8x8xi32>
    %cst_49 = arith.constant 0.000000e+00 : f32
    %143 = vector.shape_cast %74 : vector<8x1xf32> to vector<8x1xf32>
    %144 = vector.broadcast %143 : vector<8x1xf32> to vector<8x8xf32>
    %145 = vector.broadcast %cst_49 : f32 to vector<8x8xf32>
    %146 = arith.select %142, %144, %145 : vector<8x8xi1>, vector<8x8xf32>
    %147 = arith.addf %140, %146 : vector<8x8xf32>
    %c6_i32 = arith.constant 6 : i32
    %148 = vector.broadcast %c6_i32 : i32 to vector<8x8xi32>
    %149 = arith.cmpi eq, %104, %148 : vector<8x8xi32>
    %cst_50 = arith.constant 0.000000e+00 : f32
    %150 = vector.shape_cast %100 : vector<8x1xf32> to vector<8x1xf32>
    %151 = vector.broadcast %150 : vector<8x1xf32> to vector<8x8xf32>
    %152 = vector.broadcast %cst_50 : f32 to vector<8x8xf32>
    %153 = arith.select %149, %151, %152 : vector<8x8xi1>, vector<8x8xf32>
    %154 = arith.addf %147, %153 : vector<8x8xf32>
    %c7_i32 = arith.constant 7 : i32
    %155 = vector.broadcast %c7_i32 : i32 to vector<8x8xi32>
    %156 = arith.cmpi eq, %104, %155 : vector<8x8xi32>
    %cst_51 = arith.constant 0.000000e+00 : f32
    %157 = vector.shape_cast %103 : vector<8x1xf32> to vector<8x1xf32>
    %158 = vector.broadcast %157 : vector<8x1xf32> to vector<8x8xf32>
    %159 = vector.broadcast %cst_51 : f32 to vector<8x8xf32>
    %160 = arith.select %156, %158, %159 : vector<8x8xi1>, vector<8x8xf32>
    %161 = arith.addf %154, %160 : vector<8x8xf32>
    %c0_52 = arith.constant 0 : index
    %c0_53 = arith.constant 0 : index
    %162 = vector.load %arg7[%c0_52, %c0_53] : memref<8x8xf32, #tpu.memory_space<vmem>>, vector<8x8xf32>
    tpu.vector_store %arg7[%c0_52, %c0_53], %161 {strides = array<i32>} : memref<8x8xf32, #tpu.memory_space<vmem>>, vector<8x8xf32>,
    return
  }
  func.func @transform_0(%arg0: i32) -> (i32, i32) {
    %c0_i32 = arith.constant 0 : i32
    %c0_i32_0 = arith.constant 0 : i32
    return %arg0, %c0_i32 : i32, i32
  }
  func.func @transform_1(%arg0: i32) -> (i32, i32) {
    %c0_i32 = arith.constant 0 : i32
    %c0_i32_0 = arith.constant 0 : i32
    return %arg0, %c0_i32 : i32, i32
  }
  func.func @transform_2(%arg0: i32) -> (i32, i32) {
    %c0_i32 = arith.constant 0 : i32
    %c0_i32_0 = arith.constant 0 : i32
    return %arg0, %c0_i32 : i32, i32
  }
  func.func @transform_3(%arg0: i32) -> (i32, i32) {
    %c0_i32 = arith.constant 0 : i32
    %c0_i32_0 = arith.constant 0 : i32
    return %arg0, %c0_i32 : i32, i32
  }
  func.func @transform_4(%arg0: i32) -> (i32, i32) {
    %c0_i32 = arith.constant 0 : i32
    %c0_i32_0 = arith.constant 0 : i32
    return %arg0, %c0_i32 : i32, i32
  }
  func.func @transform_5(%arg0: i32) -> (i32, i32) {
    %c0_i32 = arith.constant 0 : i32
    %c0_i32_0 = arith.constant 0 : i32
    return %arg0, %c0_i32 : i32, i32
  }
  func.func @transform_6(%arg0: i32) -> (i32, i32) {
    %c0_i32 = arith.constant 0 : i32
    %c0_i32_0 = arith.constant 0 : i32
    return %arg0, %c0_i32 : i32, i32
  }
}

</mosaic_0001>

<llo_original>
// kernel: _loss_biaf_rl_fused.1
$region0: #{_loss_biaf_rl_fused.1}
  #allocation0 [shape = 'u32[]', space=smem, size = 0x4, offset = 0x4, fixed_abs, tag = 'smem constant byte address 0x4 - core index']
  #allocation1 [shape = 'u32[144,128]{1,0:T(1,128)}', space=vmem, size = 0x12000, scoped, tag = 'internal scratch']
  %s0 = inlined_call_operand.vmem [shape: s32[8,16], index: 0, kind: input, shape index: {}]
  %s1 = inlined_call_operand.vmem [shape: f32[8,16], index: 1, kind: input, shape index: {}]
  %s2 = inlined_call_operand.vmem [shape: s32[8,16], index: 2, kind: input, shape index: {}]
  %s3 = inlined_call_operand.vmem [shape: s32[8,16], index: 3, kind: input, shape index: {}]
  %s4 = inlined_call_operand.vmem [shape: s32[8,16], index: 4, kind: input, shape index: {}]
  %s5 = inlined_call_operand.vmem [shape: f32[8,8], index: 5, kind: input, shape index: {}]
  %s6 = inlined_call_operand.vmem [shape: f32[8,8], index: 6, kind: output, shape index: {}]
  %s7 = sld [smem:[#allocation0]]
  $region34: #{_loss_biaf_rl_fused.1} parent=0
    _
  %s9 = ssub.s32 1, %s7
  %s10 = scalar_select 0, %s9, %s7
  // Predicated region
  $region2: #{_loss_biaf_rl_fused.1} parent=0 // pred_check
    _
  $region3: #{_loss_biaf_rl_fused.1} parent=0 // pred_check_branch
    %12 = sbr.rel (0) target = $region5
  $region4: #{_loss_biaf_rl_fused.1} parent=0 // pred_region
    _
  $region5: #{_loss_biaf_rl_fused.1} parent=0 // pred_fallthru
    _
  // Predicated region
  $region6: #{_loss_biaf_rl_fused.1} parent=0 // pred_check
    _
  $region7: #{_loss_biaf_rl_fused.1} parent=0 // pred_check_branch
    %14 = sbr.rel (0) target = $region9
  $region8: #{_loss_biaf_rl_fused.1} parent=0 // pred_region
    _
  $region9: #{_loss_biaf_rl_fused.1} parent=0 // pred_fallthru
    _
  // Predicated region
  $region10: #{_loss_biaf_rl_fused.1} parent=0 // pred_check
    _
  $region11: #{_loss_biaf_rl_fused.1} parent=0 // pred_check_branch
    %16 = sbr.rel (0) target = $region13
  $region12: #{_loss_biaf_rl_fused.1} parent=0 // pred_region
    _
  $region13: #{_loss_biaf_rl_fused.1} parent=0 // pred_fallthru
    _
  // Predicated region
  $region14: #{_loss_biaf_rl_fused.1} parent=0 // pred_check
    _
  $region15: #{_loss_biaf_rl_fused.1} parent=0 // pred_check_branch
    %18 = sbr.rel (0) target = $region17
  $region16: #{_loss_biaf_rl_fused.1} parent=0 // pred_region
    _
  $region17: #{_loss_biaf_rl_fused.1} parent=0 // pred_fallthru
    _
  // Predicated region
  $region18: #{_loss_biaf_rl_fused.1} parent=0 // pred_check
    _
  $region19: #{_loss_biaf_rl_fused.1} parent=0 // pred_check_branch
    %20 = sbr.rel (0) target = $region21
  $region20: #{_loss_biaf_rl_fused.1} parent=0 // pred_region
    _
  $region21: #{_loss_biaf_rl_fused.1} parent=0 // pred_fallthru
    _
  // Predicated region
  $region22: #{_loss_biaf_rl_fused.1} parent=0 // pred_check
    _
  $region23: #{_loss_biaf_rl_fused.1} parent=0 // pred_check_branch
    %22 = sbr.rel (0) target = $region25
  $region24: #{_loss_biaf_rl_fused.1} parent=0 // pred_region
    _
  $region25: #{_loss_biaf_rl_fused.1} parent=0 // pred_fallthru
    _
  %v23 = vld [vmem:[%s5] sm:$0xff]
  %v24 = vcvt.f32.s32.to.zero.pseudo %v23
  %v25 = vlaneseq
  %v26 = vand.u32 %v25, 127
  %vm27 = vcmp.lt.s32.totalorder %v24, 16
  %v28 = vsel %vm27, %v24, 16
  %29 = vset.pattern.permute.xlu0 0
  %30 = vperm.xlu0 %29, %v28
  %v31 = vpop.permute.xlu0 %30
  %vm32 = vcmp.lt.s32.totalorder %v26, %v31
  %vm33 = vcmp.gt.s32.totalorder %v26, 0
  %vm34 = vmand %vm32, %vm33
  %v35 = vadd.s32 %v24, 1
  %vm36 = vcmp.lt.s32.totalorder %v35, 16
  %v37 = vsel %vm36, %v35, 16
  %38 = vset.pattern.permute.xlu0 0
  %39 = vperm.xlu0 %38, %v37
  %v40 = vpop.permute.xlu0 %39
  %vm41 = vcmp.lt.s32.totalorder %v26, %v40
  %v42 = vld [vmem:[%s2] sm:$0xff]
  %v43 = vld [vmem:[%s3] sm:$0xff]
  %v44 = vld [vmem:[%s4] sm:$0xff]
  %vm45 = vcmp.ne.s32.totalorder %v42, %v43
  %vm46 = vcmp.ne.s32.totalorder %v42, %v44
  %vm47 = vcmp.eq.s32.totalorder %v43, %v44
  %v48 = vsel %vm45, 1.0, 0.0
  %v49 = vsel %vm46, 16.0, 0.0
  %v50 = vadd.f32 %v48, %v49
  %v51 = vsel %vm47, 256.0, 0.0
  %v52 = vadd.f32 %v50, %v51
  %v53 = vsel %vm34, %v52, 0.0
  %vm54 = vcmask 130048
  %v55 = vsel %vm54, %v53, 0.0
  %56 = vadd.xlane.f32.xlu0 %v55
  %v57 = vpop.xlane.xlu0 %56
  %v58 = vcvt.f32.s32.to.zero.pseudo %v57
  %v59 = vand.u32 %v58, 15
  %v60 = vcvt.s32.f32 %v59
  %v61 = vshra.s32 %v58, 4
  %v62 = vand.u32 %v61, 15
  %v63 = vcvt.s32.f32 %v62
  %v64 = vshra.s32 %v58, 8
  %v65 = vcvt.s32.f32 %v64
  %v66 = vld [vmem:[%s0] sm:$0xff]
  %vm67 = vcmp.eq.s32.totalorder %v66, 0
  %vm68 = vmand %vm67, %vm32
  %v69 = vsel %vm68, 1.0, 0.0
  %v70 = vsel %vm54, %v69, 0.0
  %71 = vadd.xlane.f32.xlu0 %v70
  %v72 = vpop.xlane.xlu0 %71
  %v73 = vcvt.s32.f32 %v24
  %v74 = vmax.f32 %v73, 1.0
  %v75 = vrcp.pop %v74
  %v76 = vsub.f32 0.0, %v72
  %v77 = vmul.f32 %v76, %v75
  %vm78 = vcmp.ge.s32.totalorder %v24, 0
  %v79 = vmul.f32 %v23, 1.442695
  %v80 = vpow.pop %v79
  %v81 = vsub.f32 0.0, %v80
  %83 = vrot.lane.b32.xlu0 %v81, 126
  %v84 = vpop.permute.xlu0 %83
  %v86 = vsel %vm78, %v84, 0.0
  %v87 = vmul.f32 %v86, 0.5
  %89 = vrot.lane.b32.xlu0 %v87, 1
  %v90 = vpop.permute.xlu0 %89
  %v92 = vadd.f32 %v23, %v90
  %v93 = vmul.f32 %v60, 2.0
  %v94 = vadd.f32 %v92, %v93
  %v95 = vmul.f32 %v63, 2.0
  %v96 = vadd.f32 %v94, %v95
  %v97 = vmul.f32 %v65, 1.5
  %v98 = vadd.f32 %v96, %v97
  %v99 = vmul.f32 %v77, 3.0
  %101 = vrot.lane.b32.xlu0 %v99, 1
  %v102 = vpop.permute.xlu0 %101
  %v104 = vadd.f32 %v98, %v102
  %v105 = vmul.f32 %v104, 0.001
  %107 = vrot.lane.b32.xlu0 %v105, 127
  %v108 = vpop.permute.xlu0 %107
  %v110 = vsel %vm78, %v108, 0.0
  %v111 = vld [vmem:[%s1] sm:$0xff]
  %v112 = vsel %vm41, %v111, 0.0
  %v113 = vsel %vm54, %v112, 0.0
  %114 = vadd.xlane.f32.xlu0 %v113
  %v115 = vpop.xlane.xlu0 %114
  %vm116 = vcmp.gt.s32.totalorder %v37, 0
  %v117 = vsel %vm116, %v37, 0
  %v118 = vcvt.s32.f32 %v117
  %vm119 = vcmask 7168
  %120 = vst.msk [vmem:[%s6] sm:$0xff] %vm119, %v60
  %vm121 = vcmask 15368
  %122 = vst.msk [vmem:[%s6] sm:$0xff] %vm121, %v63
  %vm123 = vcmask 23568
  %124 = vst.msk [vmem:[%s6] sm:$0xff] %vm123, %v65
  %126 = vrot.lane.b32.xlu0 %v77, 3
  %v127 = vpop.permute.xlu0 %126
  %vm129 = vcmask 31768
  %130 = vst.msk [vmem:[%s6] sm:$0xff] %vm129, %v127
  %132 = vrot.lane.b32.xlu0 %v110, 4
  %v133 = vpop.permute.xlu0 %132
  %vm135 = vcmask 39968
  %136 = vst.msk [vmem:[%s6] sm:$0xff] %vm135, %v133
  %138 = vrot.lane.b32.xlu0 %v86, 5
  %v139 = vpop.permute.xlu0 %138
  %vm141 = vcmask 48168
  %142 = vst.msk [vmem:[%s6] sm:$0xff] %vm141, %v139
  %vm143 = vcmask 56368
  %144 = vst.msk [vmem:[%s6] sm:$0xff] %vm143, %v115
  %146 = vrot.lane.b32.xlu0 %v118, 7
  %v147 = vpop.permute.xlu0 %146
  %vm149 = vcmask 64568
  %150 = vst.msk [vmem:[%s6] sm:$0xff] %vm149, %v147
  // Predicated region
  $region26: #{_loss_biaf_rl_fused.1} parent=0 // pred_check
    _
  $region27: #{_loss_biaf_rl_fused.1} parent=0 // pred_check_branch
    %152 = sbr.rel (0) target = $region29
  $region28: #{_loss_biaf_rl_fused.1} parent=0 // pred_region
    _
  $region29: #{_loss_biaf_rl_fused.1} parent=0 // pred_fallthru
    _
  // Predicated region
  $region30: #{_loss_biaf_rl_fused.1} parent=0 // pred_check
    _
  $region31: #{_loss_biaf_rl_fused.1} parent=0 // pred_check_branch
    %154 = sbr.rel (0) target = $region33
  $region32: #{_loss_biaf_rl_fused.1} parent=0 // pred_region
    _
  $region33: #{_loss_biaf_rl_fused.1} parent=0 // pred_fallthru
    _

// kernel: _loss_biaf_rl_fused.1
$region0: #{_loss_biaf_rl_fused.1}
  #allocation0 [shape = 'u32[]', space=smem, size = 0x4, offset = 0x4, fixed_abs, tag = 'smem constant byte address 0x4 - core index']
  #allocation1 [shape = 'u32[144,128]{1,0:T(1,128)}', space=vmem, size = 0x12000, scoped, tag = 'internal scratch']
  %s0 = inlined_call_operand.vmem [shape: s32[8,16], index: 0, kind: input, shape index: {}]
  %s1 = inlined_call_operand.vmem [shape: f32[8,16], index: 1, kind: input, shape index: {}]
  %s2 = inlined_call_operand.vmem [shape: s32[8,16], index: 2, kind: input, shape index: {}]
  %s3 = inlined_call_operand.vmem [shape: s32[8,16], index: 3, kind: input, shape index: {}]
  %s4 = inlined_call_operand.vmem [shape: s32[8,16], index: 4, kind: input, shape index: {}]
  %s5 = inlined_call_operand.vmem [shape: f32[8,8], index: 5, kind: input, shape index: {}]
  %s6 = inlined_call_operand.vmem [shape: f32[8,8], index: 6, kind: output, shape index: {}]
  %s7 = sld [smem:[#allocation0]]
  $region34: #{_loss_biaf_rl_fused.1} parent=0
    _
  %s9 = ssub.s32 1, %s7
  %s10 = scalar_select 0, %s9, %s7
  // Predicated region
  $region2: #{_loss_biaf_rl_fused.1} parent=0 // pred_check
    _
  $region3: #{_loss_biaf_rl_fused.1} parent=0 // pred_check_branch
    %12 = sbr.rel (0) target = $region5
  $region4: #{_loss_biaf_rl_fused.1} parent=0 // pred_region
    _
  $region5: #{_loss_biaf_rl_fused.1} parent=0 // pred_fallthru
    _
  // Predicated region
  $region6: #{_loss_biaf_rl_fused.1} parent=0 // pred_check
    _
  $region7: #{_loss_biaf_rl_fused.1} parent=0 // pred_check_branch
    %14 = sbr.rel (0) target = $region9
  $region8: #{_loss_biaf_rl_fused.1} parent=0 // pred_region
    _
  $region9: #{_loss_biaf_rl_fused.1} parent=0 // pred_fallthru
    _
  // Predicated region
  $region10: #{_loss_biaf_rl_fused.1} parent=0 // pred_check
    _
  $region11: #{_loss_biaf_rl_fused.1} parent=0 // pred_check_branch
    %16 = sbr.rel (0) target = $region13
  $region12: #{_loss_biaf_rl_fused.1} parent=0 // pred_region
    _
  $region13: #{_loss_biaf_rl_fused.1} parent=0 // pred_fallthru
    _
  // Predicated region
  $region14: #{_loss_biaf_rl_fused.1} parent=0 // pred_check
    _
  $region15: #{_loss_biaf_rl_fused.1} parent=0 // pred_check_branch
    %18 = sbr.rel (0) target = $region17
  $region16: #{_loss_biaf_rl_fused.1} parent=0 // pred_region
    _
  $region17: #{_loss_biaf_rl_fused.1} parent=0 // pred_fallthru
    _
  // Predicated region
  $region18: #{_loss_biaf_rl_fused.1} parent=0 // pred_check
    _
  $region19: #{_loss_biaf_rl_fused.1} parent=0 // pred_check_branch
    %20 = sbr.rel (0) target = $region21
  $region20: #{_loss_biaf_rl_fused.1} parent=0 // pred_region
    _
  $region21: #{_loss_biaf_rl_fused.1} parent=0 // pred_fallthru
    _
  // Predicated region
  $region22: #{_loss_biaf_rl_fused.1} parent=0 // pred_check
    _
  $region23: #{_loss_biaf_rl_fused.1} parent=0 // pred_check_branch
    %22 = sbr.rel (0) target = $region25
  $region24: #{_loss_biaf_rl_fused.1} parent=0 // pred_region
    _
  $region25: #{_loss_biaf_rl_fused.1} parent=0 // pred_fallthru
    _
  %v23 = vld [vmem:[%s5] sm:$0xff]
  %v24 = vcvt.f32.s32.to.zero.pseudo %v23
  %v25 = vlaneseq
  %v26 = vand.u32 %v25, 127
  %vm27 = vcmp.lt.s32.totalorder %v24, 16
  %v28 = vsel %vm27, %v24, 16
  %29 = vset.pattern.permute.xlu0 0
  %30 = vperm.xlu0 %29, %v28
  %v31 = vpop.permute.xlu0 %30
  %vm32 = vcmp.lt.s32.totalorder %v26, %v31
  %vm33 = vcmp.gt.s32.totalorder %v26, 0
  %vm34 = vmand %vm32, %vm33
  %v35 = vadd.s32 %v24, 1
  %vm36 = vcmp.lt.s32.totalorder %v35, 16
  %v37 = vsel %vm36, %v35, 16
  %38 = vset.pattern.permute.xlu0 0
  %39 = vperm.xlu0 %38, %v37
  %v40 = vpop.permute.xlu0 %39
  %vm41 = vcmp.lt.s32.totalorder %v26, %v40
  %v42 = vld [vmem:[%s2] sm:$0xff]
  %v43 = vld [vmem:[%s3] sm:$0xff]
  %v44 = vld [vmem:[%s4] sm:$0xff]
  %vm45 = vcmp.ne.s32.totalorder %v42, %v43
  %vm46 = vcmp.ne.s32.totalorder %v42, %v44
  %vm47 = vcmp.eq.s32.totalorder %v43, %v44
  %v48 = vsel %vm45, 1.0, 0.0
  %v49 = vsel %vm46, 16.0, 0.0
  %v50 = vadd.f32 %v48, %v49
  %v51 = vsel %vm47, 256.0, 0.0
  %v52 = vadd.f32 %v50, %v51
  %v53 = vsel %vm34, %v52, 0.0
  %vm54 = vcmask 130048
  %v55 = vsel %vm54, %v53, 0.0
  %56 = vadd.xlane.f32.xlu0 %v55
  %v57 = vpop.xlane.xlu0 %56
  %v58 = vcvt.f32.s32.to.zero.pseudo %v57
  %v59 = vand.u32 %v58, 15
  %v60 = vcvt.s32.f32 %v59
  %v61 = vshra.s32 %v58, 4
  %v62 = vand.u32 %v61, 15
  %v63 = vcvt.s32.f32 %v62
  %v64 = vshra.s32 %v58, 8
  %v65 = vcvt.s32.f32 %v64
  %v66 = vld [vmem:[%s0] sm:$0xff]
  %vm67 = vcmp.eq.s32.totalorder %v66, 0
  %vm68 = vmand %vm67, %vm32
  %v69 = vsel %vm68, 1.0, 0.0
  %v70 = vsel %vm54, %v69, 0.0
  %71 = vadd.xlane.f32.xlu0 %v70
  %v72 = vpop.xlane.xlu0 %71
  %v73 = vcvt.s32.f32 %v24
  %v74 = vmax.f32 %v73, 1.0
  %v75 = vrcp.pop %v74
  %v76 = vsub.f32 0.0, %v72
  %v77 = vmul.f32 %v76, %v75
  %vm78 = vcmp.ge.s32.totalorder %v24, 0
  %v79 = vmul.f32 %v23, 1.442695
  %v80 = vpow.pop %v79
  %v81 = vsub.f32 0.0, %v80
  %83 = vrot.lane.b32.xlu0 %v81, 126
  %v84 = vpop.permute.xlu0 %83
  %v86 = vsel %vm78, %v84, 0.0
  %v87 = vmul.f32 %v86, 0.5
  %89 = vrot.lane.b32.xlu0 %v87, 1
  %v90 = vpop.permute.xlu0 %89
  %v92 = vadd.f32 %v23, %v90
  %v93 = vmul.f32 %v60, 2.0
  %v94 = vadd.f32 %v92, %v93
  %v95 = vmul.f32 %v63, 2.0
  %v96 = vadd.f32 %v94, %v95
  %v97 = vmul.f32 %v65, 1.5
  %v98 = vadd.f32 %v96, %v97
  %v99 = vmul.f32 %v77, 3.0
  %101 = vrot.lane.b32.xlu0 %v99, 1
  %v102 = vpop.permute.xlu0 %101
  %v104 = vadd.f32 %v98, %v102
  %v105 = vmul.f32 %v104, 0.001
  %107 = vrot.lane.b32.xlu0 %v105, 127
  %v108 = vpop.permute.xlu0 %107
  %v110 = vsel %vm78, %v108, 0.0
  %v111 = vld [vmem:[%s1] sm:$0xff]
  %v112 = vsel %vm41, %v111, 0.0
  %v113 = vsel %vm54, %v112, 0.0
  %114 = vadd.xlane.f32.xlu0 %v113
  %v115 = vpop.xlane.xlu0 %114
  %vm116 = vcmp.gt.s32.totalorder %v37, 0
  %v117 = vsel %vm116, %v37, 0
  %v118 = vcvt.s32.f32 %v117
  %vm119 = vcmp.eq.s32.totalorder %v26, 0
  %v120 = vsel %vm119, %v60, 0.0
  %v121 = vadd.f32 %v120, 0.0
  %vm122 = vcmp.eq.s32.totalorder %v26, 1
  %v123 = vsel %vm122, %v63, 0.0
  %v124 = vadd.f32 %v121, %v123
  %vm125 = vcmp.eq.s32.totalorder %v26, 2
  %v126 = vsel %vm125, %v65, 0.0
  %v127 = vadd.f32 %v124, %v126
  %vm128 = vcmp.eq.s32.totalorder %v26, 3
  %130 = vset.pattern.permute.xlu0 0
  %131 = vperm.xlu0 %130, %v77
  %v132 = vpop.permute.xlu0 %131
  %v134 = vsel %vm128, %v132, 0.0
  %v135 = vadd.f32 %v127, %v134
  %vm136 = vcmp.eq.s32.totalorder %v26, 4
  %138 = vset.pattern.permute.xlu0 0
  %139 = vperm.xlu0 %138, %v110
  %v140 = vpop.permute.xlu0 %139
  %v142 = vsel %vm136, %v140, 0.0
  %v143 = vadd.f32 %v135, %v142
  %vm144 = vcmp.eq.s32.totalorder %v26, 5
  %146 = vset.pattern.permute.xlu0 0
  %147 = vperm.xlu0 %146, %v86
  %v148 = vpop.permute.xlu0 %147
  %v150 = vsel %vm144, %v148, 0.0
  %v151 = vadd.f32 %v143, %v150
  %vm152 = vcmp.eq.s32.totalorder %v26, 6
  %v153 = vsel %vm152, %v115, 0.0
  %v154 = vadd.f32 %v151, %v153
  %vm155 = vcmp.eq.s32.totalorder %v26, 7
  %157 = vset.pattern.permute.xlu0 0
  %158 = vperm.xlu0 %157, %v118
  %v159 = vpop.permute.xlu0 %158
  %v161 = vsel %vm155, %v159, 0.0
  %v162 = vadd.f32 %v154, %v161
  %vm163 = vcmask 64512
  %164 = vst.msk [vmem:[%s6] sm:$0xff] %vm163, %v162
  // Predicated region
  $region26: #{_loss_biaf_rl_fused.1} parent=0 // pred_check
    _
  $region27: #{_loss_biaf_rl_fused.1} parent=0 // pred_check_branch
    %166 = sbr.rel (0) target = $region29
  $region28: #{_loss_biaf_rl_fused.1} parent=0 // pred_region
    _
  $region29: #{_loss_biaf_rl_fused.1} parent=0 // pred_fallthru
    _
  // Predicated region
  $region30: #{_loss_biaf_rl_fused.1} parent=0 // pred_check
    _
  $region31: #{_loss_biaf_rl_fused.1} parent=0 // pred_check_branch
    %168 = sbr.rel (0) target = $region33
  $region32: #{_loss_biaf_rl_fused.1} parent=0 // pred_region
    _
  $region33: #{_loss_biaf_rl_fused.1} parent=0 // pred_fallthru
    _

</llo_original>
